<compile_context>
chip_gen: v7x
topology: tpu7x:2x2x1
jax: 0.10.0
libtpu: 0.0.40
codegen_flags: <defaults>
</compile_context>

<pallas_src>
import jax
import jax.numpy as jnp
from jax.experimental import pallas as pl
from jax.experimental.pallas import tpu as pltpu

# ----------------------------------------------------------------------------
# config (small, synthetic)
# ----------------------------------------------------------------------------
B, C, H, W = 2, 3, 16, 16
NUM_PROPOSALS = 8
HIDDEN_DIM = 32
NUM_CLASSES = 2
PIXEL_MEAN = jnp.array([123.675, 116.28, 103.53], dtype=jnp.float32)
PIXEL_STD = jnp.array([58.395, 57.12, 57.375], dtype=jnp.float32)

_VMEM_LIMIT = 32 << 20  # safe on v5e/v6e (128 MiB) and v7x (64 MiB physical)


# ----------------------------------------------------------------------------
# Kernel 1: image normalization  (x - pixel_mean[c]) * inv_std[c]
#   Lane-dense layout: rows = B*C, lanes = H*W.  Tiled on both axes with a
#   pl.cdiv grid (edge blocks are clipped on writeback), both axes "parallel"
#   so v7x's two TensorCores split the work.  Per-row mean / 1/std are (rows,1)
#   VMEM columns broadcast across lanes in-register.
# ----------------------------------------------------------------------------
def _normalize_kernel(mean_ref, inv_std_ref, x_ref, o_ref):
    x = x_ref[...].astype(jnp.float32)
    o_ref[...] = ((x - mean_ref[...]) * inv_std_ref[...]).astype(o_ref.dtype)


def normalize_images(images, pixel_mean, pixel_std, *, tile_r=8, tile_hw=2048,
                     out_dtype=jnp.float32):
    b, c, h, w = images.shape
    hw = h * w
    r = b * c
    x2d = images.reshape(r, hw)  # contiguous view, no HBM pass

    # per-row broadcast columns built once (tiny)
    mean_col = jnp.tile(pixel_mean, b).reshape(r, 1).astype(jnp.float32)
    inv_std_col = jnp.tile(1.0 / pixel_std, b).reshape(r, 1).astype(jnp.float32)

    # row tile: full rows if small, else a multiple of 8; lane tile: full if
    # small, else a multiple of 128.  pl.cdiv handles remainders (no fallback
    # to one giant block, so production H*W never blows the VMEM budget).
    tr = r if r <= tile_r else tile_r
    thw = hw if hw <= tile_hw else tile_hw
    grid = (pl.cdiv(r, tr), pl.cdiv(hw, thw))

    itemsize = jnp.dtype(images.dtype).itemsize
    out = pl.pallas_call(
        _normalize_kernel,
        out_shape=jax.ShapeDtypeStruct((r, hw), out_dtype),
        grid=grid,
        in_specs=[
            pl.BlockSpec((tr, 1), lambda i, j: (i, 0)),
            pl.BlockSpec((tr, 1), lambda i, j: (i, 0)),
            pl.BlockSpec((tr, thw), lambda i, j: (i, j)),
        ],
        out_specs=pl.BlockSpec((tr, thw), lambda i, j: (i, j)),
        compiler_params=pltpu.CompilerParams(
            dimension_semantics=("parallel", "parallel"),
            vmem_limit_bytes=_VMEM_LIMIT),
        cost_estimate=pl.CostEstimate(
            flops=2 * r * hw,
            transcendentals=0,
            bytes_accessed=r * hw * itemsize
                           + r * hw * jnp.dtype(out_dtype).itemsize
                           + 2 * r * 4),
    )(mean_col, inv_std_col, x2d)
    return out.reshape(b, c, h, w)


# ----------------------------------------------------------------------------
# Kernel 2: prepare_proposals
#   box_cxcywh_to_xyxy -> % 1 -> * images_whwh -> adjust_box (coord swap).
#   Coordinate-major (4, Npad) boxes with Npad padded to 128 lanes.  Compute on
#   2-row slabs (x/y low and high corners together), scale with (B*2,1) VMEM
#   whwh columns, and write 2-row slabs into two (B*2, Npad) outputs (min/max
#   corners).  Wrapper reassembles the (B, N, 4) PyTorch layout.
# ----------------------------------------------------------------------------
def _proposal_kernel(scale_lo_ref, scale_hi_ref, boxes_ref, omin_ref, omax_ref):
    cxy = boxes_ref[0:2, :]          # (2, Npad): cx, cy
    wh = boxes_ref[2:4, :]           # (2, Npad): w, h
    lo = cxy - 0.5 * wh              # x1, y1
    hi = cxy + 0.5 * wh              # x2, y2
    # torch `% 1` (floor-mod, non-negative result for positive divisor)
    lo = lo - jnp.floor(lo)
    hi = hi - jnp.floor(hi)

    nb = omin_ref.shape[0] // 2      # static batch count (small unroll)
    for i in range(nb):
        a = lo * scale_lo_ref[2 * i:2 * i + 2, :]   # scaled (x1, y1)
        c = hi * scale_hi_ref[2 * i:2 * i + 2, :]   # scaled (x2, y2)
        # adjust_box: swap coordinates if x2 < x1 or y2 < y1
        omin_ref[2 * i:2 * i + 2, :] = jnp.minimum(a, c)
        omax_ref[2 * i:2 * i + 2, :] = jnp.maximum(a, c)


def prepare_proposals(init_proposal_boxes, images_whwh):
    # init_proposal_boxes: (N, 4) cxcywh ; images_whwh: (B, 4) [w, h, w, h]
    n = init_proposal_boxes.shape[0]
    b = images_whwh.shape[0]
    n_pad = max(128, ((n + 127) // 128) * 128)  # lane-dense proposal axis

    boxes_t = jnp.zeros((4, n_pad), jnp.float32).at[:, :n].set(
        init_proposal_boxes.T.astype(jnp.float32))
    whwh = images_whwh.astype(jnp.float32)
    scale_lo = whwh[:, 0:2].reshape(b * 2, 1)   # scales for (x1, y1)
    scale_hi = whwh[:, 2:4].reshape(b * 2, 1)   # scales for (x2, y2)

    out_min, out_max = pl.pallas_call(
        _proposal_kernel,
        out_shape=(jax.ShapeDtypeStruct((b * 2, n_pad), jnp.float32),
                   jax.ShapeDtypeStruct((b * 2, n_pad), jnp.float32)),
        in_specs=[
            pl.BlockSpec((b * 2, 1), lambda: (0, 0)),
            pl.BlockSpec((b * 2, 1), lambda: (0, 0)),
            pl.BlockSpec((4, n_pad), lambda: (0, 0)),
        ],
        out_specs=(pl.BlockSpec((b * 2, n_pad), lambda: (0, 0)),
                   pl.BlockSpec((b * 2, n_pad), lambda: (0, 0))),
    )(scale_lo, scale_hi, boxes_t)

    out = jnp.concatenate([out_min.reshape(b, 2, n_pad),
                           out_max.reshape(b, 2, n_pad)], axis=1)  # (B,4,Npad)
    out = out[:, :, :n]
    return jnp.transpose(out, (0, 2, 1))  # (B, N, 4) PyTorch convention


# ----------------------------------------------------------------------------
# Kernel 3: sigmoid scoring for inference (use_focal=True branch)
#   Exact sigmoid (correctness feedback: no approx reciprocal) on the raw
#   (B, N*K) layout — no wrapper-side astype/pad/reshape HBM passes; cast (if
#   any) happens in-register.  exp goes to the EUP.
# ----------------------------------------------------------------------------
def _sigmoid_kernel(x_ref, o_ref):
    x = x_ref[...].astype(jnp.float32)
    o_ref[...] = 1.0 / (1.0 + jnp.exp(-x))


def sigmoid_scores(box_cls):
    b, n, k = box_cls.shape
    x2d = box_cls.reshape(b, n * k)  # contiguous view
    itemsize = jnp.dtype(box_cls.dtype).itemsize
    out = pl.pallas_call(
        _sigmoid_kernel,
        out_shape=jax.ShapeDtypeStruct((b, n * k), jnp.float32),
        in_specs=[pl.BlockSpec((b, n * k), lambda: (0, 0))],
        out_specs=pl.BlockSpec((b, n * k), lambda: (0, 0)),
        compiler_params=pltpu.CompilerParams(vmem_limit_bytes=_VMEM_LIMIT),
        cost_estimate=pl.CostEstimate(
            flops=2 * b * n * k,
            transcendentals=b * n * k,
            bytes_accessed=b * n * k * (itemsize + 4)),
    )(x2d)
    return out.reshape(b, n, k)


def inference_focal(box_cls, box_pred, num_classes, num_proposals):
    """Mirrors MSBCNet.inference (use_focal=True): sigmoid -> flatten -> top-k.
    top-k is vmapped; labels/box indices are derived arithmetically instead of
    materializing repeated label/box buffers."""
    scores = sigmoid_scores(box_cls)              # (B, N, K) — Pallas hot path
    b, n, k = scores.shape
    flat = scores.reshape(b, n * k)
    top_scores, top_idx = jax.vmap(lambda s: jax.lax.top_k(s, num_proposals))(flat)
    pred_classes = (top_idx % k).astype(jnp.int32)            # label = idx % K
    box_idx = top_idx // k                                    # proposal = idx // K
    pred_boxes = jnp.take_along_axis(box_pred, box_idx[..., None], axis=1)
    return {"scores": top_scores, "pred_classes": pred_classes,
            "pred_boxes": pred_boxes}


# ----------------------------------------------------------------------------
# Kernel 4: dice_coefficient
#   dice_m = (2*sum(in*tgt,1) + eps) / (sum(in,1) + sum(tgt,1) + eps); mean over m
#   Grid = (m tiles "parallel", lane tiles "arbitrary").  Per-step work is pure
#   VPU element-wise accumulation into (tile_m, tile_l) scratch; the single XLU
#   lane reduction happens once in the finalize branch.  bf16/int inputs are
#   cast to f32 in-register (halves HBM bytes vs f32 masks).
# ----------------------------------------------------------------------------
def _make_dice_kernel(tile_l, l_total, need_mask):
    def _dice_kernel(a_ref, b_ref, o_ref, inter_acc, denom_acc):
        lstep = pl.program_id(1)

        @pl.when(lstep == 0)
        def _():
            inter_acc[...] = jnp.zeros_like(inter_acc)
            denom_acc[...] = jnp.zeros_like(denom_acc)

        a = a_ref[...].astype(jnp.float32)
        b = b_ref[...].astype(jnp.float32)
        if need_mask:  # zero out lanes past the real length in the edge block
            lane = jax.lax.broadcasted_iota(jnp.int32, a.shape, 1) + lstep * tile_l
            valid = lane < l_total
            a = jnp.where(valid, a, 0.0)
            b = jnp.where(valid, b, 0.0)

        inter_acc[...] += a * b         # VPU only
        denom_acc[...] += a + b         # fused sum(a)+sum(b)

        @pl.when(lstep == pl.num_programs(1) - 1)
        def _():
            smooth = 1e-08
            inter = jnp.sum(inter_acc[...], axis=1, keepdims=True)   # single XLU pass
            denom = jnp.sum(denom_acc[...], axis=1, keepdims=True)
            o_ref[...] = (2.0 * inter + smooth) / (denom + smooth)

    return _dice_kernel


def dice_coefficient(inp, tgt, *, tile_m=16, tile_l=2048):
    m, l = inp.shape
    tm = m if m <= tile_m else tile_m          # multiple of 8/16 or full dim
    tl = l if l <= tile_l else tile_l          # multiple of 128 or full dim
    need_mask = (l % tl) != 0
    grid = (pl.cdiv(m, tm), pl.cdiv(l, tl))
    itemsize = jnp.dtype(inp.dtype).itemsize

    per_row = pl.pallas_call(
        _make_dice_kernel(tl, l, need_mask),
        out_shape=jax.ShapeDtypeStruct((m, 1), jnp.float32),
        grid=grid,
        in_specs=[
            pl.BlockSpec((tm, tl), lambda i, j: (i, j)),
            pl.BlockSpec((tm, tl), lambda i, j: (i, j)),
        ],
        out_specs=pl.BlockSpec((tm, 1), lambda i, j: (i, 0)),
        scratch_shapes=[pltpu.VMEM((tm, tl), jnp.float32),
                        pltpu.VMEM((tm, tl), jnp.float32)],
        compiler_params=pltpu.CompilerParams(
            dimension_semantics=("parallel", "arbitrary"),
            vmem_limit_bytes=_VMEM_LIMIT),
        cost_estimate=pl.CostEstimate(
            flops=4 * m * l,
            transcendentals=0,
            bytes_accessed=2 * m * l * itemsize + m * 4),
    )(inp, tgt)
    return jnp.mean(per_row[:, 0])


# ----------------------------------------------------------------------------
# Forward (inference path, mask_on=False pieces that are defined in the module)
# ----------------------------------------------------------------------------
def msbcnet_forward(batched_images, init_proposal_boxes):
    # preprocess_image
    norm_images = normalize_images(batched_images, PIXEL_MEAN, PIXEL_STD)
    whwh = jnp.tile(jnp.array([W, H, W, H], dtype=jnp.float32),
                    (batched_images.shape[0], 1))
    # prepare_proposals
    proposal_boxes = prepare_proposals(init_proposal_boxes, whwh)
    # TODO(synk): src = backbone(norm_images); outputs = DynamicHead(src, proposal_boxes,
    #             init_proposal_features) — external components, not defined in the module.
    return norm_images, proposal_boxes, whwh


if __name__ == "__main__":
    key = jax.random.PRNGKey(0)
    k_img, k_feat, k_logits, k_boxes, k_m1, k_m2 = jax.random.split(key, 6)

    # inputs
    images = jax.random.uniform(k_img, (B, C, H, W), jnp.float32) * 255.0

    # parameters (deterministic, per __init__)
    init_proposal_boxes = jnp.concatenate(
        [jnp.full((NUM_PROPOSALS, 2), 0.5, jnp.float32),
         jnp.full((NUM_PROPOSALS, 2), 1.0, jnp.float32)],
        axis=1,
    )
    init_proposal_features = 0.02 * jax.random.normal(
        k_feat, (NUM_PROPOSALS, HIDDEN_DIM), jnp.float32
    )  # unused without DynamicHead (see TODO above)

    # forward (computable portion)
    norm_images, proposal_boxes, whwh = msbcnet_forward(images, init_proposal_boxes)

    # inference stage (focal branch) on stand-in head outputs
    box_cls = jax.random.normal(k_logits, (B, NUM_PROPOSALS, NUM_CLASSES), jnp.float32)
    box_pred = jax.random.uniform(k_boxes, (B, NUM_PROPOSALS, 4), jnp.float32) * W
    results = inference_focal(box_cls, box_pred, NUM_CLASSES, NUM_PROPOSALS)

    # dice_coefficient on synthetic binary masks (as used in postprogress)
    # bf16 halves HBM bytes; 0/1 values are exact in bf16, cast to f32 in-kernel.
    m_pred = (jax.random.uniform(k_m1, (B, H * W)) > 0.5).astype(jnp.bfloat16)
    m_gt = (jax.random.uniform(k_m2, (B, H * W)) > 0.5).astype(jnp.bfloat16)
    dice = dice_coefficient(m_pred, m_gt)

    jax.block_until_ready(norm_images)
    jax.block_until_ready(proposal_boxes)
    jax.block_until_ready(results["scores"])
    jax.block_until_ready(results["pred_boxes"])
    jax.block_until_ready(results["pred_classes"])
    jax.block_until_ready(dice)

    # ---- sanity checks against pure-JAX references ----
    ref_norm = (images - PIXEL_MEAN[None, :, None, None]) / PIXEL_STD[None, :, None, None]
    assert jnp.allclose(norm_images, ref_norm, atol=1e-5)

    # prepare_proposals reference
    pb = init_proposal_boxes
    xyxy = jnp.concatenate([pb[:, :2] - 0.5 * pb[:, 2:], pb[:, :2] + 0.5 * pb[:, 2:]], axis=1)
    xyxy = xyxy - jnp.floor(xyxy)                     # torch `% 1`
    scaled = xyxy[None] * whwh[:, None, :]            # (B, N, 4)
    ref_prop = jnp.stack(
        [jnp.minimum(scaled[..., 0], scaled[..., 2]),
         jnp.minimum(scaled[..., 1], scaled[..., 3]),
         jnp.maximum(scaled[..., 0], scaled[..., 2]),
         jnp.maximum(scaled[..., 1], scaled[..., 3])], axis=-1)
    assert proposal_boxes.shape == (B, NUM_PROPOSALS, 4)
    assert jnp.allclose(proposal_boxes, ref_prop, atol=1e-4)
    assert bool(jnp.all(proposal_boxes[..., 2] >= proposal_boxes[..., 0]))
    assert bool(jnp.all(proposal_boxes[..., 3] >= proposal_boxes[..., 1]))

    # sigmoid scoring (exact divide -> tight tolerance)
    assert jnp.allclose(sigmoid_scores(box_cls), jax.nn.sigmoid(box_cls), atol=1e-5)

    # dice reference (f32)
    smooth = 1e-08
    mp32 = m_pred.astype(jnp.float32)
    mg32 = m_gt.astype(jnp.float32)
    inter = jnp.sum(mp32 * mg32, axis=1)
    ref_dice = jnp.mean((2.0 * inter + smooth) /
                        (jnp.sum(mp32, axis=1) + jnp.sum(mg32, axis=1) + smooth))
    assert jnp.allclose(dice, ref_dice, atol=1e-6)

    print("KERNEL_OK")
</pallas_src>

<mosaic_0001>
module attributes {stable_mosaic.version = 11 : i64} {
  func.func @_normalize_kernel(%arg0: i32, %arg1: i32, %arg2: memref<6x1xf32, #tpu.memory_space<vmem>>, %arg3: memref<6x1xf32, #tpu.memory_space<vmem>>, %arg4: memref<6x256xf32, #tpu.memory_space<vmem>>, %arg5: memref<6x256xf32, #tpu.memory_space<vmem>>) attributes {dimension_semantics = [#tpu.dimension_semantics<parallel>, #tpu.dimension_semantics<parallel>], iteration_bounds = array<i64: 1, 1>, scalar_prefetch = 0 : i64, scratch_operands = 0 : i64, tpu.core_type = #tpu.core_type<tc>, window_params = [{transform_indices = @transform_0, window_bounds = array<i64: 6, 1>}, {transform_indices = @transform_1, window_bounds = array<i64: 6, 1>}, {transform_indices = @transform_2, window_bounds = array<i64: 6, 256>}, {transform_indices = @transform_3, window_bounds = array<i64: 6, 256>}]} {
    %c0 = arith.constant 0 : index
    %c0_0 = arith.constant 0 : index
    %0 = vector.load %arg4[%c0, %c0_0] : memref<6x256xf32, #tpu.memory_space<vmem>>, vector<6x256xf32>
    %c0_1 = arith.constant 0 : index
    %c0_2 = arith.constant 0 : index
    %1 = vector.load %arg2[%c0_1, %c0_2] : memref<6x1xf32, #tpu.memory_space<vmem>>, vector<6x1xf32>
    %2 = vector.broadcast %1 : vector<6x1xf32> to vector<6x256xf32>
    %3 = arith.subf %0, %2 : vector<6x256xf32>
    %c0_3 = arith.constant 0 : index
    %c0_4 = arith.constant 0 : index
    %4 = vector.load %arg3[%c0_3, %c0_4] : memref<6x1xf32, #tpu.memory_space<vmem>>, vector<6x1xf32>
    %5 = vector.broadcast %4 : vector<6x1xf32> to vector<6x256xf32>
    %6 = arith.mulf %3, %5 : vector<6x256xf32>
    %c0_5 = arith.constant 0 : index
    %c0_6 = arith.constant 0 : index
    %7 = vector.load %arg5[%c0_5, %c0_6] : memref<6x256xf32, #tpu.memory_space<vmem>>, vector<6x256xf32>
    tpu.vector_store %arg5[%c0_5, %c0_6], %6 {strides = array<i32>} : memref<6x256xf32, #tpu.memory_space<vmem>>, vector<6x256xf32>,
    return
  }
  func.func @transform_0(%arg0: i32, %arg1: i32) -> (i32, i32) {
    %c0_i32 = arith.constant 0 : i32
    %c0_i32_0 = arith.constant 0 : i32
    return %arg0, %c0_i32 : i32, i32
  }
  func.func @transform_1(%arg0: i32, %arg1: i32) -> (i32, i32) {
    %c0_i32 = arith.constant 0 : i32
    %c0_i32_0 = arith.constant 0 : i32
    return %arg0, %c0_i32 : i32, i32
  }
  func.func @transform_2(%arg0: i32, %arg1: i32) -> (i32, i32) {
    %c0_i32 = arith.constant 0 : i32
    return %arg0, %arg1 : i32, i32
  }
  func.func @transform_3(%arg0: i32, %arg1: i32) -> (i32, i32) {
    %c0_i32 = arith.constant 0 : i32
    return %arg0, %arg1 : i32, i32
  }
}

</mosaic_0001>

<llo_original>
// kernel: tpu_custom_call.1
$region0: #{tpu_custom_call.1}
  #allocation0 [shape = 'u32[]', space=smem, size = 0x4, offset = 0x4, fixed_abs, tag = 'smem constant byte address 0x4 - core index']
  #allocation1 [shape = 'u32[144,128]{1,0:T(1,128)}', space=vmem, size = 0x12000, scoped, tag = 'internal scratch']
  %s0 = inlined_call_operand.vmem [shape: f32[6,1], index: 0, kind: input, shape index: {}]
  %s1 = inlined_call_operand.vmem [shape: f32[6,1], index: 1, kind: input, shape index: {}]
  %s2 = inlined_call_operand.vmem [shape: f32[6,256], index: 2, kind: input, shape index: {}]
  %s3 = inlined_call_operand.hbm [shape: f32[6,256], index: 3, kind: output, shape index: {}]
  %s4 = sld [smem:[#allocation0]]
  $region22: #{tpu_custom_call.1} parent=0
    _
  %s6 = ssub.s32 1, %s4
  %s7 = scalar_select 0, %s6, %s4
  $region1: #{tpu_custom_call.1} parent=0
    #allocation2 [shape = 'u8[8192]{0}', space=vmem, size = 0x2000, scoped, tag = 'output window, operand 0, single buffered']
    #allocation3 [shape = 's32[1]{0}', space=sflag, size = 0x4, scoped, tag = 'scoped memory for tpu_custom_call.1']
    %8 = vsyncpa [#allocation3], 0
    // Predicated region
    $region2: #{tpu_custom_call.1} parent=1 // pred_check
      _
    $region3: #{tpu_custom_call.1} parent=1 // pred_check_branch
      %10 = sbr.rel (0) target = $region5
    $region4: #{tpu_custom_call.1} parent=1 // pred_region
      _
    $region5: #{tpu_custom_call.1} parent=1 // pred_fallthru
      _
    // Predicated region
    $region6: #{tpu_custom_call.1} parent=1 // pred_check
      _
    $region7: #{tpu_custom_call.1} parent=1 // pred_check_branch
      %12 = sbr.rel (0) target = $region9
    $region8: #{tpu_custom_call.1} parent=1 // pred_region
      _
    $region9: #{tpu_custom_call.1} parent=1 // pred_fallthru
      _
    // Predicated region
    $region10: #{tpu_custom_call.1} parent=1 // pred_check
      _
    $region11: #{tpu_custom_call.1} parent=1 // pred_check_branch
      %14 = sbr.rel (0) target = $region13
    $region12: #{tpu_custom_call.1} parent=1 // pred_region
      _
    $region13: #{tpu_custom_call.1} parent=1 // pred_fallthru
      _
    %v15 = vld [vmem:[%s2] sm:$0x3f]
    %v16 = vld [vmem:[%s2 + $0x8] sm:$0x3f]
    %v17 = vld [vmem:[%s0] sm:$0x3f]
    %19 = vset.pattern.permute.xlu0 0
    %20 = vperm.xlu0 %19, %v17
    %v21 = vpop.permute.xlu0 %20
    %v23 = vsub.f32 %v15, %v21
    %v24 = vsub.f32 %v16, %v21
    %v25 = vld [vmem:[%s1] sm:$0x3f]
    %27 = vset.pattern.permute.xlu0 0
    %28 = vperm.xlu0 %27, %v25
    %v29 = vpop.permute.xlu0 %28
    %v31 = vmul.f32 %v23, %v29
    %v32 = vmul.f32 %v24, %v29
    %33 = vst [vmem:[#allocation2] sm:$0x3f] %v31
    %34 = vst [vmem:[#allocation2 + $0x8] sm:$0x3f] %v32
    // Predicated region
    $region14: #{tpu_custom_call.1} parent=1 // pred_check
      _
    $region15: #{tpu_custom_call.1} parent=1 // pred_check_branch
      %36 = sbr.rel (0) target = $region17
    $region16: #{tpu_custom_call.1} parent=1 // pred_region
      %s38 = ssub.s32 256, 256
      %39 = vsyncadd [#allocation3], %s38
      %s41 = sshll.u32 [#allocation2], 4
      %s42 = int_to_ptr.vmem [resolvable:$true] %s41
      %44 = dma.vmem_to_hbm [thread:$0]  %s42, 256, %s3, [#allocation3]
    $region17: #{tpu_custom_call.1} parent=1 // pred_fallthru
      _
    // Predicated region
    $region18: #{tpu_custom_call.1} parent=1 // pred_check
      _
    $region19: #{tpu_custom_call.1} parent=1 // pred_check_branch
      %46 = sbr.rel (0) target = $region21
    $region20: #{tpu_custom_call.1} parent=1 // pred_region
      %47 = dma.done [#allocation3], 256
    $region21: #{tpu_custom_call.1} parent=1 // pred_fallthru
      _
    %48 = vsyncpa [#allocation3], 1

</llo_original>
